<compile_context>
chip_gen: v7x
topology: tpu7x:2x2x1
jax: 0.10.0
libtpu: 0.0.40
codegen_flags: <defaults>
</compile_context>

<pallas_src>
import functools

import jax
import jax.numpy as jnp
from jax.experimental import pallas as pl
from jax.experimental.pallas import tpu as pltpu


def layernorm_kernel(x_ref, gamma_ref, beta_ref, o_ref, *, eps, embed_dim):
    x = x_ref[...].astype(jnp.float32)            # (rows_tile, D)
    gamma = gamma_ref[...]                        # (1, D) f32 (pre-cast in wrapper)
    beta = beta_ref[...]                          # (1, D) f32

    # mean over the last (lane) dim
    mean = jnp.mean(x, axis=-1, keepdims=True)    # (rows_tile, 1)

    # torch.Tensor.std default is unbiased (Bessel correction: divide by N-1).
    denom = max(embed_dim - 1, 1)                 # guard embed_dim == 1
    var_unbiased = jnp.sum(jnp.square(x - mean), axis=-1, keepdims=True) / denom
    std = jnp.sqrt(var_unbiased)

    # NOTE: eps is added to std (not variance) — matches the PyTorch module.
    # Exact per-row reciprocal on the (rows_tile, 1) column; leaves only cheap
    # full-width multiplies/adds on the VPU.
    inv = pl.reciprocal(std + eps, approx=False)  # (rows_tile, 1)

    # Recompute (x - mean) here instead of reusing a persisted full-tile f32 temp
    # (keeps the largest in-kernel temporary from staying live across the
    # variance reduction — matters most on v7x's 64 MiB VMEM).
    o_ref[...] = ((x - mean) * inv * gamma + beta).astype(o_ref.dtype)


def _vmem_capacity_bytes():
    """Physical VMEM of the attached TPU (128 MiB v5e/v6e, 64 MiB v7x)."""
    try:
        return int(pltpu.get_tpu_info().vmem_capacity_bytes)
    except Exception:
        return 128 * 1024 * 1024  # conservative fallback


def _sublane(dtype):
    """Second-to-last block-dim granularity: 8 (4B), 16 (2B), 32 (1B)."""
    itemsize = jnp.dtype(dtype).itemsize
    return max(8, 32 // max(itemsize, 1))


def _cdiv(a, b):
    return -(-a // b)


def _choose_rows_tile(R, D, dtype):
    """Sublane-aligned row tile sized by bytes, VMEM budget, and pipeline depth."""
    itemsize = jnp.dtype(dtype).itemsize
    sub = _sublane(dtype)
    vmem = _vmem_capacity_bytes()

    # Dtype-aware pipelined working set per row (bytes):
    #   2x double-buffered input + 2x double-buffered output
    #   + one f32 copy of x only when the input isn't already f32 (the astype).
    f32_temp = 0 if itemsize == 4 else 4
    bytes_per_row = D * (4 * itemsize + f32_temp)
    budget = vmem // 2                             # leave half of physical VMEM free
    rows_cap = max(sub, budget // max(bytes_per_row, 1))

    # Size by bytes, not a fixed row cap: target a ~4 MiB input tile
    # (hits ~85% of HBM roofline and amortizes ~0.35 us/grid-step overhead).
    target_rows = max(sub, (4 << 20) // max(D * itemsize, 1))
    rows = min(target_rows, rows_cap)
    rows = max(sub, (rows // sub) * sub)

    # Don't exceed the (sublane-padded) problem size.
    r_pad = _cdiv(R, sub) * sub
    rows = max(sub, min(rows, r_pad))

    # Keep the pipeline fed: aim for >= 4 grid steps (>= 2 per v7x TensorCore,
    # and enough steps on single-TC v5e/v6e to hide prologue/epilogue DMAs),
    # but don't shrink the input tile below ~1 MiB once >= 2 steps exist.
    floor_rows = max(sub, (1 << 20) // max(D * itemsize, 1))
    while rows > sub and _cdiv(R, rows) < 4:
        next_rows = max(sub, ((rows // 2) // sub) * sub)
        if _cdiv(R, rows) >= 2 and next_rows < floor_rows:
            break
        rows = next_rows

    # TODO(synk): for very large D where even an 8-row tile blows the VMEM budget,
    # chunk the reduction over D (two-pass over D tiles) instead of this clamp.
    return rows


def layer_norm(x, gamma, beta, *, eps=1e-6, rows_tile=None):
    """x: (..., embed_dim). gamma, beta: (embed_dim,)."""
    orig_shape = x.shape
    D = orig_shape[-1]
    x2 = x.reshape(-1, D)                          # (R, D), reduction axis on lanes
    R = x2.shape[0]

    if rows_tile is None:
        rows_tile = _choose_rows_tile(R, D, x.dtype)

    # Pre-cast params to f32 once in the wrapper (kernel uses them directly).
    gamma2 = gamma.astype(jnp.float32).reshape(1, D)
    beta2 = beta.astype(jnp.float32).reshape(1, D)

    # No padding / slicing: Pallas masks the partial last block's stores.
    grid = (_cdiv(R, rows_tile),)

    itemsize = jnp.dtype(x.dtype).itemsize
    tile_bytes = rows_tile * D * itemsize
    f32_temp = 0 if itemsize == 4 else rows_tile * D * 4
    needed = 4 * tile_bytes + f32_temp + 4 * D * 4
    vmem_cap = _vmem_capacity_bytes()
    # Headroom over `needed` for Mosaic internal scratch; cap at 75% of physical
    # so v7x's 64 MiB is never exceeded.
    vmem_limit = int(min(max(needed + (16 << 20), 32 << 20), int(vmem_cap * 0.75)))

    cost = pl.CostEstimate(
        flops=7 * R * D,                           # sub, sq, sums, muls, add per element
        transcendentals=2 * R,                     # sqrt + reciprocal per row
        bytes_accessed=R * D * 2 * itemsize + 2 * D * 4,
    )

    kernel = functools.partial(layernorm_kernel, eps=eps, embed_dim=D)

    out = pl.pallas_call(
        kernel,
        out_shape=jax.ShapeDtypeStruct((R, D), x.dtype),
        grid_spec=pltpu.PrefetchScalarGridSpec(
            num_scalar_prefetch=0,
            grid=grid,
            in_specs=[
                pl.BlockSpec((rows_tile, D), lambda i: (i, 0)),
                pl.BlockSpec((1, D), lambda i: (0, 0)),   # constant index: no re-DMA
                pl.BlockSpec((1, D), lambda i: (0, 0)),
            ],
            out_specs=pl.BlockSpec((rows_tile, D), lambda i: (i, 0)),
        ),
        compiler_params=pltpu.CompilerParams(
            dimension_semantics=("parallel",),
            vmem_limit_bytes=vmem_limit,
        ),
        cost_estimate=cost,
    )(x2, gamma2, beta2)

    return out.reshape(orig_shape)


def layer_norm_ref(x, gamma, beta, eps=1e-6):
    x32 = x.astype(jnp.float32)
    mean = jnp.mean(x32, axis=-1, keepdims=True)
    centered = x32 - mean
    D = x.shape[-1]
    std = jnp.sqrt(jnp.sum(centered * centered, axis=-1, keepdims=True) / max(D - 1, 1))
    return (gamma.astype(jnp.float32) * centered / (std + eps)
            + beta.astype(jnp.float32)).astype(x.dtype)


if __name__ == "__main__":
    key = jax.random.PRNGKey(0)
    batch, seq, embed_dim = 2, 8, 32

    x = jax.random.normal(key, (batch, seq, embed_dim), dtype=jnp.float32)
    # Deterministic parameter init, matching nn.Parameter(torch.ones/zeros(embed_dim))
    gamma = jnp.ones((embed_dim,), dtype=jnp.float32)
    beta = jnp.zeros((embed_dim,), dtype=jnp.float32)

    out = jax.block_until_ready(layer_norm(x, gamma, beta, eps=1e-6))
    ref = layer_norm_ref(x, gamma, beta, eps=1e-6)
    assert out.shape == x.shape
    assert jnp.allclose(out, ref, atol=1e-5, rtol=1e-5), "mismatch vs reference"

    # Non-trivial gamma/beta to exercise the affine path.
    k1, k2 = jax.random.split(jax.random.PRNGKey(2))
    gamma_r = 1.0 + 0.1 * jax.random.normal(k1, (embed_dim,), dtype=jnp.float32)
    beta_r = 0.1 * jax.random.normal(k2, (embed_dim,), dtype=jnp.float32)
    out_r = jax.block_until_ready(layer_norm(x, gamma_r, beta_r, eps=1e-6))
    assert jnp.allclose(out_r, layer_norm_ref(x, gamma_r, beta_r, eps=1e-6),
                        atol=1e-5, rtol=1e-5), "mismatch vs reference (affine)"

    # Ragged row count (not a multiple of the chosen tile -> masked partial last block).
    x_odd = jax.random.normal(jax.random.PRNGKey(1), (3, 5, embed_dim), dtype=jnp.float32)
    out_odd = jax.block_until_ready(layer_norm(x_odd, gamma, beta, eps=1e-6))
    assert jnp.allclose(out_odd, layer_norm_ref(x_odd, gamma, beta, eps=1e-6),
                        atol=1e-5, rtol=1e-5), "mismatch vs reference (ragged)"

    print("KERNEL_OK")
</pallas_src>

<mosaic_0001>
module attributes {stable_mosaic.version = 11 : i64} {
  func.func @layernorm_kernel(%arg0: i32, %arg1: memref<8x32xf32, #tpu.memory_space<vmem>>, %arg2: memref<1x32xf32, #tpu.memory_space<vmem>>, %arg3: memref<1x32xf32, #tpu.memory_space<vmem>>, %arg4: memref<8x32xf32, #tpu.memory_space<vmem>>) attributes {dimension_semantics = [#tpu.dimension_semantics<parallel>], iteration_bounds = array<i64: 2>, scalar_prefetch = 0 : i64, scratch_operands = 0 : i64, tpu.core_type = #tpu.core_type<tc>, window_params = [{transform_indices = @transform_0, window_bounds = array<i64: 8, 32>}, {pipeline_mode = #tpu.pipeline_mode<synchronous>, transform_indices = @transform_1, window_bounds = array<i64: 1, 32>}, {pipeline_mode = #tpu.pipeline_mode<synchronous>, transform_indices = @transform_2, window_bounds = array<i64: 1, 32>}, {transform_indices = @transform_3, window_bounds = array<i64: 8, 32>}]} {
    %c0 = arith.constant 0 : index
    %c0_0 = arith.constant 0 : index
    %0 = vector.load %arg1[%c0, %c0_0] : memref<8x32xf32, #tpu.memory_space<vmem>>, vector<8x32xf32>
    %c0_1 = arith.constant 0 : index
    %c0_2 = arith.constant 0 : index
    %1 = vector.load %arg2[%c0_1, %c0_2] : memref<1x32xf32, #tpu.memory_space<vmem>>, vector<1x32xf32>
    %c0_3 = arith.constant 0 : index
    %c0_4 = arith.constant 0 : index
    %2 = vector.load %arg3[%c0_3, %c0_4] : memref<1x32xf32, #tpu.memory_space<vmem>>, vector<1x32xf32>
    %cst = arith.constant dense<0.000000e+00> : vector<8xf32>
    %3 = vector.multi_reduction <add>, %0, %cst [1] : vector<8x32xf32> to vector<8xf32>
    %4 = vector.shape_cast %3 : vector<8xf32> to vector<8x1xf32>
    %cst_5 = arith.constant 3.200000e+01 : f32
    %5 = vector.broadcast %cst_5 : f32 to vector<8x1xf32>
    %6 = arith.divf %4, %5 : vector<8x1xf32>
    %7 = vector.broadcast %6 : vector<8x1xf32> to vector<8x32xf32>
    %8 = arith.subf %0, %7 : vector<8x32xf32>
    %9 = arith.mulf %8, %8 : vector<8x32xf32>
    %cst_6 = arith.constant dense<0.000000e+00> : vector<8xf32>
    %10 = vector.multi_reduction <add>, %9, %cst_6 [1] : vector<8x32xf32> to vector<8xf32>
    %11 = vector.shape_cast %10 : vector<8xf32> to vector<8x1xf32>
    %cst_7 = arith.constant 3.100000e+01 : f32
    %12 = vector.broadcast %cst_7 : f32 to vector<8x1xf32>
    %13 = arith.divf %11, %12 : vector<8x1xf32>
    %14 = math.sqrt %13 : vector<8x1xf32>
    %cst_8 = arith.constant 9.99999997E-7 : f32
    %15 = vector.broadcast %cst_8 : f32 to vector<8x1xf32>
    %16 = arith.addf %14, %15 : vector<8x1xf32>
    %17 = tpu.reciprocal %16 : vector<8x1xf32> -> vector<8x1xf32>
    %18 = vector.broadcast %6 : vector<8x1xf32> to vector<8x32xf32>
    %19 = arith.subf %0, %18 : vector<8x32xf32>
    %20 = vector.broadcast %17 : vector<8x1xf32> to vector<8x32xf32>
    %21 = arith.mulf %19, %20 : vector<8x32xf32>
    %22 = vector.broadcast %1 : vector<1x32xf32> to vector<8x32xf32>
    %23 = arith.mulf %21, %22 : vector<8x32xf32>
    %24 = vector.broadcast %2 : vector<1x32xf32> to vector<8x32xf32>
    %25 = arith.addf %23, %24 : vector<8x32xf32>
    %c0_9 = arith.constant 0 : index
    %c0_10 = arith.constant 0 : index
    %26 = vector.load %arg4[%c0_9, %c0_10] : memref<8x32xf32, #tpu.memory_space<vmem>>, vector<8x32xf32>
    tpu.vector_store %arg4[%c0_9, %c0_10], %25 {strides = array<i32>} : memref<8x32xf32, #tpu.memory_space<vmem>>, vector<8x32xf32>,
    return
  }
  func.func @transform_0(%arg0: i32) -> (i32, i32) {
    %c0_i32 = arith.constant 0 : i32
    %c0_i32_0 = arith.constant 0 : i32
    return %arg0, %c0_i32 : i32, i32
  }
  func.func @transform_1(%arg0: i32) -> (i32, i32) {
    %c0_i32 = arith.constant 0 : i32
    %c0_i32_0 = arith.constant 0 : i32
    %c0_i32_1 = arith.constant 0 : i32
    return %c0_i32, %c0_i32_0 : i32, i32
  }
  func.func @transform_2(%arg0: i32) -> (i32, i32) {
    %c0_i32 = arith.constant 0 : i32
    %c0_i32_0 = arith.constant 0 : i32
    %c0_i32_1 = arith.constant 0 : i32
    return %c0_i32, %c0_i32_0 : i32, i32
  }
  func.func @transform_3(%arg0: i32) -> (i32, i32) {
    %c0_i32 = arith.constant 0 : i32
    %c0_i32_0 = arith.constant 0 : i32
    return %arg0, %c0_i32 : i32, i32
  }
}

</mosaic_0001>

<llo_original>
// kernel: tpu_custom_call.1
$region0: #{tpu_custom_call.1}
  #allocation0 [shape = 'u32[]', space=smem, size = 0x4, offset = 0x4, fixed_abs, tag = 'smem constant byte address 0x4 - core index']
  #allocation1 [shape = 'u32[144,128]{1,0:T(1,128)}', space=vmem, size = 0x12000, scoped, tag = 'internal scratch']
  %s0 = inlined_call_operand.hbm [shape: f32[16,32], index: 0, kind: input, shape index: {}]
  %s1 = inlined_call_operand.vmem [shape: f32[1,32], index: 1, kind: input, shape index: {}]
  %s2 = inlined_call_operand.vmem [shape: f32[1,32], index: 2, kind: input, shape index: {}]
  %s3 = inlined_call_operand.hbm [shape: f32[16,32], index: 3, kind: output, shape index: {}]
  %s4 = sld [smem:[#allocation0]]
  $region49: #{tpu_custom_call.1} parent=0
    _
  %s6 = ssub.s32 1, %s4
  %s7 = scalar_select 0, %s6, %s4
  $region1: #{tpu_custom_call.1} parent=0
    #allocation2 [shape = 'u8[8192]{0}', space=vmem, size = 0x2000, scoped, tag = 'input window, operand 0']
    #allocation3 [shape = 's32[2]{0}', space=sflag, size = 0x8, scoped, tag = 'scoped memory for tpu_custom_call.1']
    #allocation4 [shape = 's32[2]{0}', space=sflag, size = 0x8, scoped, tag = 'scoped memory for tpu_custom_call.1']
    #allocation5 [shape = 'u8[8192]{0}', space=vmem, size = 0x2000, scoped, tag = 'output window, operand 0']
    %8 = vsyncpa [#allocation3], 0
    %s9 = scalar_lea.sflag [#allocation3], 1
    %10 = vsyncpa %s9, 0
    %11 = vsyncpa [#allocation4], 0
    %s12 = scalar_lea.sflag [#allocation4], 1
    %13 = vsyncpa %s12, 0
    loop: start=0, step=1, limit=4
    $region2: #{tpu_custom_call.1} parent=1 // loop_pre_header
      _
    $region3: #{tpu_custom_call.1} parent=1 // loop_header
      %s15 = sphi 0, %s19
      %p16 = scmp.ge.s32.totalorder %s15, 4
      %s25 = sphi 0, %s27
      %s28 = sphi 0, %s25
      %s29 = sphi 0, %s28
      %s45 = sphi 0, %s29
      %s49 = sphi 0, %s49
      %s51 = sphi 0, %s49
      %s52 = sphi 0, %s51
      %s66 = sphi 0, %s52
      %s70 = sphi 0, %s70
      %s72 = sphi 0, %s70
      %s73 = sphi 0, %s72
      %s87 = sphi 0, %s73
      %s93 = sphi 0, %s95
      %s96 = sphi 0, %s93
      %s97 = sphi 0, %s96
      %s113 = sphi 0, %s97
    $region4: #{tpu_custom_call.1} parent=1 // loop_header_branch
      %18 = sbr.rel (%p16) target = $region8
    $region5: #{tpu_custom_call.1} parent=1 // loop_body
      %s20 = ssub.s32 %s15, 1
      %s21 = ssub.s32 %s15, 2
      %s22 = sadd.s32 %s15, 1
      %s23 = ssub.s32 %s15, %s22
      %p24 = scmp.eq.s32.totalorder %s23, 0
      %s26 = sadd.s32 %s25, 1
      %s27 = scalar_select %p24, %s25, %s26
      %p30 = pneg %p24
      %p31 = scmp.eq.s32.totalorder %s15, 1
      %p32 = por %p30, %p31
      %p33 = scmp.ne.s32.totalorder %s25, %s28
      %p34 = scmp.eq.s32.totalorder %s15, 0
      %p35 = por %p33, %p34
      %p36 = scmp.ne.s32.totalorder %s25, %s28
      %p37 = scmp.eq.s32.totalorder %s20, 1
      %p38 = por %p36, %p37
      %p39 = scmp.ne.s32.totalorder %s28, %s29
      %p40 = scmp.eq.s32.totalorder %s20, 0
      %p41 = por %p39, %p40
      %p42 = scmp.ne.s32.totalorder %s28, %s29
      %p43 = scmp.eq.s32.totalorder %s21, 1
      %p44 = por %p42, %p43
      %p46 = scmp.ne.s32.totalorder %s29, %s45
      %p47 = scmp.eq.s32.totalorder %s21, 0
      %p48 = por %p46, %p47
      %s50 = sadd.s32 %s49, 1
      %p53 = scmp.eq.s32.totalorder %s15, 1
      %p54 = scmp.ne.s32.totalorder %s49, %s51
      %p55 = scmp.eq.s32.totalorder %s15, 0
      %p56 = por %p54, %p55
      %p57 = scmp.ne.s32.totalorder %s49, %s51
      %p58 = scmp.eq.s32.totalorder %s20, 1
      %p59 = por %p57, %p58
      %p60 = scmp.ne.s32.totalorder %s51, %s52
      %p61 = scmp.eq.s32.totalorder %s20, 0
      %p62 = por %p60, %p61
      %p63 = scmp.ne.s32.totalorder %s51, %s52
      %p64 = scmp.eq.s32.totalorder %s21, 1
      %p65 = por %p63, %p64
      %p67 = scmp.ne.s32.totalorder %s52, %s66
      %p68 = scmp.eq.s32.totalorder %s21, 0
      %p69 = por %p67, %p68
      %s71 = sadd.s32 %s70, 1
      %p74 = scmp.eq.s32.totalorder %s15, 1
      %p75 = scmp.ne.s32.totalorder %s70, %s72
      %p76 = scmp.eq.s32.totalorder %s15, 0
      %p77 = por %p75, %p76
      %p78 = scmp.ne.s32.totalorder %s70, %s72
      %p79 = scmp.eq.s32.totalorder %s20, 1
      %p80 = por %p78, %p79
      %p81 = scmp.ne.s32.totalorder %s72, %s73
      %p82 = scmp.eq.s32.totalorder %s20, 0
      %p83 = por %p81, %p82
      %p84 = scmp.ne.s32.totalorder %s72, %s73
      %p85 = scmp.eq.s32.totalorder %s21, 1
      %p86 = por %p84, %p85
      %p88 = scmp.ne.s32.totalorder %s73, %s87
      %p89 = scmp.eq.s32.totalorder %s21, 0
      %p90 = por %p88, %p89
      %s91 = ssub.s32 %s15, %s22
      %p92 = scmp.eq.s32.totalorder %s91, 0
      %s94 = sadd.s32 %s93, 1
      %s95 = scalar_select %p92, %s93, %s94
      %p98 = pneg %p92
      %p99 = scmp.eq.s32.totalorder %s15, 1
      %p100 = por %p98, %p99
      %p101 = scmp.ne.s32.totalorder %s93, %s96
      %p102 = scmp.eq.s32.totalorder %s15, 0
      %p103 = por %p101, %p102
      %p104 = scmp.ne.s32.totalorder %s93, %s96
      %p105 = scmp.eq.s32.totalorder %s20, 1
      %p106 = por %p104, %p105
      %p107 = scmp.ne.s32.totalorder %s96, %s97
      %p108 = scmp.eq.s32.totalorder %s20, 0
      %p109 = por %p107, %p108
      %p110 = scmp.ne.s32.totalorder %s96, %s97
      %p111 = scmp.eq.s32.totalorder %s21, 1
      %p112 = por %p110, %p111
      %p114 = scmp.ne.s32.totalorder %s97, %s113
      %p115 = scmp.eq.s32.totalorder %s21, 0
      %p116 = por %p114, %p115
      %p117 = scmp.le.s32.totalorder 1, %s15
      %p118 = scmp.lt.s32.totalorder %s15, 3
      %p119 = pnand %p117, %p118
      %p120 = pneg %p119
      // Predicated region
      $region9: #{tpu_custom_call.1} parent=5 // pred_check
        _
      $region10: #{tpu_custom_call.1} parent=5 // pred_check_branch
        %122 = sbr.rel (%p119) target = $region12
      $region11: #{tpu_custom_call.1} parent=5 // pred_region
        %s123 = ssub.s32 %s15, 1
        // Predicated region
        $region13: #{tpu_custom_call.1} parent=11 // pred_check
          %p124 = pneg %p62
        $region14: #{tpu_custom_call.1} parent=11 // pred_check_branch
          %126 = sbr.rel (%p124) target = $region16
        $region15: #{tpu_custom_call.1} parent=11 // pred_region
          _
        $region16: #{tpu_custom_call.1} parent=11 // pred_fallthru
          _
        // Predicated region
        $region17: #{tpu_custom_call.1} parent=11 // pred_check
          %p127 = pneg %p83
        $region18: #{tpu_custom_call.1} parent=11 // pred_check_branch
          %129 = sbr.rel (%p127) target = $region20
        $region19: #{tpu_custom_call.1} parent=11 // pred_region
          _
        $region20: #{tpu_custom_call.1} parent=11 // pred_fallthru
          _
      $region12: #{tpu_custom_call.1} parent=5 // pred_fallthru
        _
      %p130 = scmp.lt.s32.totalorder %s15, 2
      // Predicated region
      $region21: #{tpu_custom_call.1} parent=5 // pred_check
        %p131 = pneg %p130
      $region22: #{tpu_custom_call.1} parent=5 // pred_check_branch
        %133 = sbr.rel (%p131) target = $region24
      $region23: #{tpu_custom_call.1} parent=5 // pred_region
        // Predicated region
        $region25: #{tpu_custom_call.1} parent=23 // pred_check
          %p134 = pneg %p35
        $region26: #{tpu_custom_call.1} parent=23 // pred_check_branch
          %136 = sbr.rel (%p134) target = $region28
        $region27: #{tpu_custom_call.1} parent=23 // pred_region
          %s137 = sand.u32 %s25, 1
          %s138 = scalar_lea.sflag [#allocation3], %s137
          %s139 = sand.u32 %s25, 1
          %s140 = smul.addr %s139, 8
          %s141 = scalar_lea.vmem [#allocation2], %s140
          %s143 = ssub.s32 128, 128
          %144 = vsyncadd %s138, %s143
          %s145 = smul.addr %s15, 128
          %s146 = scalar_lea.hbm %s0, %s145
          %s148 = sshll.u32 %s141, 4
          %s149 = int_to_ptr.vmem [resolvable:$true] %s148
          %151 = dma.hbm_to_vmem [thread:$0]  %s146, 128, %s149, %s138
        $region28: #{tpu_custom_call.1} parent=23 // pred_fallthru
          _
      $region24: #{tpu_custom_call.1} parent=5 // pred_fallthru
        _
      %p152 = scmp.le.s32.totalorder 1, %s15
      %p153 = scmp.lt.s32.totalorder %s15, 3
      %p154 = pnand %p152, %p153
      %p155 = pneg %p154
      // Predicated region
      $region29: #{tpu_custom_call.1} parent=5 // pred_check
        _
      $region30: #{tpu_custom_call.1} parent=5 // pred_check_branch
        %157 = sbr.rel (%p154) target = $region32
      $region31: #{tpu_custom_call.1} parent=5 // pred_region
        %s158 = ssub.s32 %s15, 1
        %s159 = sand.u32 %s28, 1
        %s160 = scalar_lea.sflag [#allocation3], %s159
        %s161 = sand.u32 %s28, 1
        %s162 = smul.addr %s161, 8
        %s163 = scalar_lea.vmem [#allocation2], %s162
        // Predicated region
        $region33: #{tpu_custom_call.1} parent=31 // pred_check
          %p164 = pneg %p41
        $region34: #{tpu_custom_call.1} parent=31 // pred_check_branch
          %166 = sbr.rel (%p164) target = $region36
        $region35: #{tpu_custom_call.1} parent=31 // pred_region
          %167 = dma.done %s160, 128
        $region36: #{tpu_custom_call.1} parent=31 // pred_fallthru
          _
        %s168 = sand.u32 %s28, 1
        %s169 = scalar_lea.sflag [#allocation3], %s168
        %s170 = sand.u32 %s28, 1
        %s171 = smul.addr %s170, 8
        %s172 = scalar_lea.vmem [#allocation2], %s171
        %p173 = pneg %p41
        %p174 = pneg %p38
        %p175 = pneg %p62
        %p176 = pneg %p59
        %p177 = pneg %p83
        %p178 = pneg %p80
        %p179 = pneg %p109
        %p180 = pneg %p106
        %s181 = sand.u32 %s96, 1
        %s182 = scalar_lea.sflag [#allocation4], %s181
        %s183 = sand.u32 %s96, 1
        %s184 = smul.addr %s183, 8
        %s185 = scalar_lea.vmem [#allocation5], %s184
        %v186 = vld [vmem:[%s163] sm:$0xff]
        %v187 = vld [vmem:[%s1] sm:$0x1]
        %v188 = vld [vmem:[%s2] sm:$0x1]
        %vm189 = vcmask 261120
        %v190 = vsel %vm189, %v186, 0.0
        %191 = vadd.xlane.f32.xlu0 %v190
        %v192 = vpop.xlane.xlu0 %191
        %v193 = vrcp.pop 32.0
        %v194 = vmul.f32 %v192, %v193
        %v195 = vsub.f32 %v186, %v194
        %v196 = vmul.f32 %v195, %v195
        %v197 = vsel %vm189, %v196, 0.0
        %198 = vadd.xlane.f32.xlu0 %v197
        %v199 = vpop.xlane.xlu0 %198
        %v200 = vrcp.pop 31.0
        %v201 = vmul.f32 %v199, %v200
        %v202 = vrsqrt.pop %v201
        %v203 = vmul.f32 %v201, %v202
        %vm204 = vcmp.eq.f32.partialorder %v201, inf
        %v205 = vsel %vm204, %v201, %v203
        %vm206 = vcmp.eq.f32.partialorder %v201, 0.0
        %v207 = vand.u32 %v201, 2147483648
        %v208 = vsel %vm206, %v207, %v205
        %v209 = vadd.f32 %v208, 1e-06
        %v210 = vrcp.pop %v209
        %v211 = vmul.f32 %v195, %v210
        %v213 = vlaneseq
        %v214 = vshrl.u32 %v213, 7
        %v215 = vsub.s32 0, %v214
        %v216 = vrot.slane %v187, %v215
        %v218 = vmul.f32 %v211, %v216
        %v220 = vlaneseq
        %v221 = vshrl.u32 %v220, 7
        %v222 = vsub.s32 0, %v221
        %v223 = vrot.slane %v188, %v222
        %v225 = vadd.f32 %v218, %v223
        %226 = vst.msk [vmem:[%s185] sm:$0xff] %vm189, %v225
        %s227 = sand.u32 %s96, 1
        %s228 = scalar_lea.sflag [#allocation4], %s227
        %s229 = sand.u32 %s96, 1
        %s230 = smul.addr %s229, 8
        %s231 = scalar_lea.vmem [#allocation5], %s230
        // Predicated region
        $region37: #{tpu_custom_call.1} parent=31 // pred_check
          %p232 = pneg %p106
        $region38: #{tpu_custom_call.1} parent=31 // pred_check_branch
          %234 = sbr.rel (%p232) target = $region40
        $region39: #{tpu_custom_call.1} parent=31 // pred_region
          %s236 = ssub.s32 128, 128
          %237 = vsyncadd %s228, %s236
          %s238 = smul.addr %s20, 128
          %s239 = scalar_lea.hbm %s3, %s238
          %s241 = sshll.u32 %s231, 4
          %s242 = int_to_ptr.vmem [resolvable:$true] %s241
          %244 = dma.vmem_to_hbm [thread:$0]  %s242, 128, %s239, %s228
        $region40: #{tpu_custom_call.1} parent=31 // pred_fallthru
          _
      $region32: #{tpu_custom_call.1} parent=5 // pred_fallthru
        _
      %p245 = scmp.le.s32.totalorder 2, %s15
      // Predicated region
      $region41: #{tpu_custom_call.1} parent=5 // pred_check
        %p246 = pneg %p245
      $region42: #{tpu_custom_call.1} parent=5 // pred_check_branch
        %248 = sbr.rel (%p246) target = $region44
      $region43: #{tpu_custom_call.1} parent=5 // pred_region
        %s249 = ssub.s32 %s15, 2
        // Predicated region
        $region45: #{tpu_custom_call.1} parent=43 // pred_check
          %p250 = pneg %p112
        $region46: #{tpu_custom_call.1} parent=43 // pred_check_branch
          %252 = sbr.rel (%p250) target = $region48
        $region47: #{tpu_custom_call.1} parent=43 // pred_region
          %s253 = sand.u32 %s97, 1
          %s254 = scalar_lea.sflag [#allocation4], %s253
          %s255 = sand.u32 %s97, 1
          %s256 = smul.addr %s255, 8
          %s257 = scalar_lea.vmem [#allocation5], %s256
          %258 = dma.done %s254, 128
        $region48: #{tpu_custom_call.1} parent=43 // pred_fallthru
          _
      $region44: #{tpu_custom_call.1} parent=5 // pred_fallthru
        _
    $region6: #{tpu_custom_call.1} parent=1 // loop_footer
      %s19 = sadd.s32 1, %s15
    $region7: #{tpu_custom_call.1} parent=1 // loop_footer_branch
      %14 = sbr.rel target = $region3
    $region8: #{tpu_custom_call.1} parent=1 // loop_exit
      _
    %259 = vsyncpa [#allocation3], 1
    %s260 = scalar_lea.sflag [#allocation3], 1
    %261 = vsyncpa %s260, 1
    %262 = vsyncpa [#allocation4], 1
    %s263 = scalar_lea.sflag [#allocation4], 1
    %264 = vsyncpa %s263, 1

</llo_original>
